<compile_context>
chip_gen: v6e
topology: v6e:2x2x1
jax: 0.10.0
libtpu: 0.0.40
codegen_flags: <defaults>
</compile_context>

<pallas_src>
from functools import partial

import jax
import jax.numpy as jnp
from jax import lax
from jax.experimental import pallas as pl
from jax.experimental.pallas import tpu as pltpu


def _cpe_kernel(strip_ref, halo_ref, w_ref, b_ref, o_ref, *,
                H, HS, W, C, apply_gelu, mask_rows):
    """One (batch, row-strip) grid step.

    strip_ref: (1, HS, W*C)   strip rows, flattened lane-dense layout (also the residual)
    halo_ref : (1, 1, 2, W*C) [row above strip, row below strip] (pre-gathered, clamped)
    w_ref    : (3, 3, W*C)    depthwise taps tiled along W (lane j uses channel j % C)
    b_ref    : (1, W*C)       bias tiled along W
    o_ref    : (1, HS, W*C)
    """
    WC = W * C
    s = pl.program_id(1)
    ns = pl.num_programs(1)

    x_in = strip_ref[0]                           # (HS, WC) — strip rows (residual source)
    x = x_in
    if mask_rows:
        # cdiv grid: the last strip may run past the image; zero those rows so they act
        # as exact zero padding and never leak garbage/NaN into valid outputs.
        row = s * HS + lax.broadcasted_iota(jnp.int32, (HS, WC), 0)
        x = jnp.where(row < H, x, jnp.zeros_like(x))

    # Pre-gathered vertical halo rows (clamped in the wrapper); zero at the image border
    # with a select (NaN-safe, unlike multiply-by-predicate).
    halo = halo_ref[0, 0]                         # (2, WC)
    zrow = jnp.zeros((1, WC), x.dtype)
    top = jnp.where(s > 0, halo[0:1], zrow)       # row above the strip
    bot = jnp.where(s < ns - 1, halo[1:2], zrow)  # row below the strip

    # Depthwise taps (read once per strip); math stays in the input dtype so bf16
    # activations stay bf16 on v6e/v7x (v5e legalizes via f32 automatically).
    w00 = w_ref[0, 0:1, :]; w01 = w_ref[0, 1:2, :]; w02 = w_ref[0, 2:3, :]
    w10 = w_ref[1, 0:1, :]; w11 = w_ref[1, 1:2, :]; w12 = w_ref[1, 2:3, :]
    w20 = w_ref[2, 0:1, :]; w21 = w_ref[2, 1:2, :]; w22 = w_ref[2, 2:3, :]
    b = b_ref[...]                                # (1, WC)

    # Vertical neighbours of every strip row (r1 == x); formed directly, no (HS+2) copy.
    if HS > 1:
        r0 = jnp.concatenate([top, x[:HS - 1]], axis=0)   # row h-1
        r2 = jnp.concatenate([x[1:], bot], axis=0)        # row h+1
    else:
        r0, r2 = top, bot

    # Vertical (dh) tap sums per horizontal offset; bias folded into the centre sum.
    cs_l = r0 * w00 + x * w10 + r2 * w20      # needs column w-1
    cs_c = r0 * w01 + x * w11 + r2 * w21 + b
    cs_r = r0 * w02 + x * w12 + r2 * w22      # needs column w+1

    feat = cs_c
    if W > 1:
        if WC % 128 == 0:
            # Horizontal halo via lane rotation by C (XLU slot) + iota border select —
            # no concat/slice copies on the lane-dense path.
            lane = lax.broadcasted_iota(jnp.int32, (HS, WC), 1)
            zero = jnp.zeros_like(cs_l)
            shifted_l = pltpu.roll(cs_l, shift=C, axis=1)       # lane j <- j - C (col w-1)
            feat = feat + jnp.where(lane >= C, shifted_l, zero)
            shifted_r = pltpu.roll(cs_r, shift=WC - C, axis=1)  # lane j <- j + C (col w+1)
            feat = feat + jnp.where(lane < WC - C, shifted_r, zero)
        else:
            # Fallback for lane widths that are not a multiple of the 128-lane tile.
            zcol = jnp.zeros((HS, C), cs_l.dtype)
            feat = feat + jnp.concatenate([zcol, cs_l[:, :WC - C]], axis=1)
            feat = feat + jnp.concatenate([cs_r[:, C:], zcol], axis=1)

    # TODO(synk): normtype == 'batch' / 'layer' branches not implemented (module default
    # normtype=False path only).
    if apply_gelu:
        feat = jax.nn.gelu(feat.astype(jnp.float32), approximate=False).astype(x.dtype)

    # Single fused store; residual comes from the already-loaded strip block.
    o_ref[0] = (x_in + feat).astype(o_ref.dtype)


def _pick_strip_rows(H, W, C, dtype, B):
    """Strip height: ~2 MiB of rows (double-buffered in+out fits v5e/v6e/v7x VMEM),
    a multiple of 8 (Mosaic sublane block constraint) or the full H, and small enough
    that B * num_strips >= 4 grid steps so both v7x TensorCores / megacore get work."""
    row_bytes = max(1, W * C * jnp.dtype(dtype).itemsize)
    hs = max(1, (2 * 1024 * 1024) // row_bytes)
    if B * ((H + hs - 1) // hs) < 4:
        want_s = (4 + B - 1) // B
        hs = min(hs, max(1, (H + want_s - 1) // want_s))
    if hs >= H or H <= 8:
        return H                                  # full-height strip (== array dim, legal)
    return max(8, (hs // 8) * 8)


def conv_pos_enc(x, size, weight, bias, *, act: bool = False):
    """ConvPosEnc forward.

    x      : (B, N, C) with N == H * W
    size   : (H, W)
    weight : (3, 3, C)  depthwise kernel — PyTorch nn.Conv2d(groups=dim) weight (C,1,3,3)
             transposed to (3, 3, C) by the caller.
    bias   : (C,)
    """
    B, N, C = x.shape
    H, W = size
    assert N == H * W
    assert weight.shape == (3, 3, C), "expect depthwise weight as (3, 3, C)"
    assert bias.shape == (C,)

    WC = W * C
    dt = x.dtype
    x_flat = x.reshape(B, H, WC)                  # metadata-only; W*C becomes the lane axis

    # Tile the per-channel taps along W so they line up with the flattened lanes.
    w_flat = jnp.tile(weight.astype(dt), (1, 1, W))          # (3, 3, W*C)
    b_flat = jnp.tile(bias.astype(dt), (W,)).reshape(1, WC)  # (1, W*C)

    HS = _pick_strip_rows(H, W, C, dt, B)
    S = pl.cdiv(H, HS)

    # Pre-gather the two vertical halo rows per strip (clamped at the image border).
    # ~2/HS of the image, read once here instead of two extra per-step DMA streams.
    s_idx = jnp.arange(S, dtype=jnp.int32)
    top_rows = jnp.clip(s_idx * HS - 1, 0, H - 1)
    bot_rows = jnp.clip((s_idx + 1) * HS, 0, H - 1)
    halo_idx = jnp.stack([top_rows, bot_rows], axis=1)       # (S, 2)
    halos = jnp.take(x_flat, halo_idx, axis=1)               # (B, S, 2, W*C)

    kernel = partial(_cpe_kernel, H=H, HS=HS, W=W, C=C,
                     apply_gelu=act, mask_rows=(S * HS != H))

    out_flat = pl.pallas_call(
        kernel,
        out_shape=jax.ShapeDtypeStruct((B, H, WC), dt),
        grid_spec=pltpu.PrefetchScalarGridSpec(
            num_scalar_prefetch=0,
            grid=(B, S),
            in_specs=[
                pl.BlockSpec((1, HS, WC), lambda b, s: (b, s, 0)),     # strip (in+residual)
                pl.BlockSpec((1, 1, 2, WC), lambda b, s: (b, s, 0, 0)),  # halo rows
                pl.BlockSpec((3, 3, WC), lambda b, s: (0, 0, 0)),      # depthwise taps
                pl.BlockSpec((1, WC), lambda b, s: (0, 0)),            # bias
            ],
            out_specs=pl.BlockSpec((1, HS, WC), lambda b, s: (b, s, 0)),
        ),
        compiler_params=pltpu.CompilerParams(
            dimension_semantics=("parallel", "parallel"),
            # Explicit scoped-VMEM budget: ~2 MiB strips double-buffered (in+out) plus
            # in-kernel temporaries fit comfortably; stays below v7x's 64 MiB physical.
            vmem_limit_bytes=48 * 1024 * 1024,
        ),
    )(x_flat, halos, w_flat, b_flat)

    return out_flat.reshape(B, N, C)


def _reference(x, size, weight, bias):
    """Pure-JAX reference (mirrors the PyTorch forward, normtype=False, act=False)."""
    B, N, C = x.shape
    H, W = size
    x_nhwc = x.reshape(B, H, W, C)
    rhs = weight.reshape(3, 3, 1, C)  # HWIO for depthwise (feature_group_count=C)
    feat = jax.lax.conv_general_dilated(
        x_nhwc.astype(jnp.float32),
        rhs.astype(jnp.float32),
        window_strides=(1, 1),
        padding=((1, 1), (1, 1)),
        dimension_numbers=("NHWC", "HWIO", "NHWC"),
        feature_group_count=C,
    ) + bias.astype(jnp.float32)
    return (x_nhwc.astype(jnp.float32) + feat).reshape(B, N, C).astype(x.dtype)


if __name__ == "__main__":
    key = jax.random.PRNGKey(0)

    def run_case(case_key, B, C, H, W):
        k_x, k_w, k_b = jax.random.split(case_key, 3)
        N = H * W
        x = jax.random.normal(k_x, (B, N, C), dtype=jnp.float32)
        # nn.Conv2d(dim, dim, 3, groups=dim).weight is (C,1,3,3); stored here as (3,3,C).
        weight = jax.random.normal(k_w, (3, 3, C), dtype=jnp.float32) * 0.1
        bias = jax.random.normal(k_b, (C,), dtype=jnp.float32) * 0.1

        out = jax.block_until_ready(conv_pos_enc(x, (H, W), weight, bias, act=False))
        ref = _reference(x, (H, W), weight, bias)
        assert out.shape == (B, N, C)
        err = float(jnp.max(jnp.abs(out - ref)))
        assert err < 1e-4, f"mismatch vs reference (B={B},C={C},H={H},W={W}): {err}"

    k1, k2 = jax.random.split(key)
    # Primary: two 8-row strips per image -> cross-strip halo path exercised; W*C = 128.
    run_case(k1, B=2, C=8, H=16, W=16)
    # Partial last strip (H=13 not a multiple of the strip height); B=1; W*C = 128.
    run_case(k2, B=1, C=16, H=13, W=8)

    print("KERNEL_OK")
</pallas_src>

<mosaic_0001>
module attributes {stable_mosaic.version = 11 : i64} {
  func.func @_cpe_kernel(%arg0: i32, %arg1: i32, %arg2: memref<1x8x128xf32, #tpu.memory_space<vmem>>, %arg3: memref<1x1x2x128xf32, #tpu.memory_space<vmem>>, %arg4: memref<3x3x128xf32, #tpu.memory_space<vmem>>, %arg5: memref<1x128xf32, #tpu.memory_space<vmem>>, %arg6: memref<1x8x128xf32, #tpu.memory_space<vmem>>) attributes {dimension_semantics = [#tpu.dimension_semantics<parallel>, #tpu.dimension_semantics<parallel>], iteration_bounds = array<i64: 2, 2>, scalar_prefetch = 0 : i64, scratch_operands = 0 : i64, tpu.core_type = #tpu.core_type<tc>, window_params = [{transform_indices = @transform_0, window_bounds = array<i64: 1, 8, 128>}, {transform_indices = @transform_1, window_bounds = array<i64: 1, 1, 2, 128>}, {pipeline_mode = #tpu.pipeline_mode<synchronous>, transform_indices = @transform_2, window_bounds = array<i64: 3, 3, 128>}, {pipeline_mode = #tpu.pipeline_mode<synchronous>, transform_indices = @transform_3, window_bounds = array<i64: 1, 128>}, {transform_indices = @transform_4, window_bounds = array<i64: 1, 8, 128>}]} {
    %c0 = arith.constant 0 : index
    %c0_0 = arith.constant 0 : index
    %c0_1 = arith.constant 0 : index
    %0 = vector.load %arg2[%c0, %c0_0, %c0_1] : memref<1x8x128xf32, #tpu.memory_space<vmem>>, vector<1x8x128xf32>
    %1 = vector.shape_cast %0 : vector<1x8x128xf32> to vector<8x128xf32>
    %c0_2 = arith.constant 0 : index
    %c0_3 = arith.constant 0 : index
    %c0_4 = arith.constant 0 : index
    %c0_5 = arith.constant 0 : index
    %2 = vector.load %arg3[%c0_2, %c0_3, %c0_4, %c0_5] : memref<1x1x2x128xf32, #tpu.memory_space<vmem>>, vector<1x1x2x128xf32>
    %3 = vector.shape_cast %2 : vector<1x1x2x128xf32> to vector<2x128xf32>
    %cst = arith.constant 0.000000e+00 : f32
    %4 = vector.broadcast %cst : f32 to vector<1x128xf32>
    %c0_i32 = arith.constant 0 : i32
    %5 = arith.cmpi sgt, %arg1, %c0_i32 : i32
    %6 = vector.extract_strided_slice %3 {offsets = [0, 0], sizes = [1, 128], strides = [1, 1]} : vector<2x128xf32> to vector<1x128xf32>
    %7 = arith.select %5, %6, %4 : vector<1x128xf32>
    %c1_i32 = arith.constant 1 : i32
    %8 = arith.cmpi slt, %arg1, %c1_i32 : i32
    %9 = vector.extract_strided_slice %3 {offsets = [1, 0], sizes = [1, 128], strides = [1, 1]} : vector<2x128xf32> to vector<1x128xf32>
    %10 = arith.select %8, %9, %4 : vector<1x128xf32>
    %c0_6 = arith.constant 0 : index
    %c0_7 = arith.constant 0 : index
    %c0_8 = arith.constant 0 : index
    %11 = vector.load %arg4[%c0_6, %c0_7, %c0_8] : memref<3x3x128xf32, #tpu.memory_space<vmem>>, vector<1x1x128xf32>
    %12 = vector.shape_cast %11 : vector<1x1x128xf32> to vector<1x128xf32>
    %c0_9 = arith.constant 0 : index
    %c1 = arith.constant 1 : index
    %c0_10 = arith.constant 0 : index
    %13 = vector.load %arg4[%c0_9, %c1, %c0_10] : memref<3x3x128xf32, #tpu.memory_space<vmem>>, vector<1x1x128xf32>
    %14 = vector.shape_cast %13 : vector<1x1x128xf32> to vector<1x128xf32>
    %c0_11 = arith.constant 0 : index
    %c2 = arith.constant 2 : index
    %c0_12 = arith.constant 0 : index
    %15 = vector.load %arg4[%c0_11, %c2, %c0_12] : memref<3x3x128xf32, #tpu.memory_space<vmem>>, vector<1x1x128xf32>
    %16 = vector.shape_cast %15 : vector<1x1x128xf32> to vector<1x128xf32>
    %c1_13 = arith.constant 1 : index
    %c0_14 = arith.constant 0 : index
    %c0_15 = arith.constant 0 : index
    %17 = vector.load %arg4[%c1_13, %c0_14, %c0_15] : memref<3x3x128xf32, #tpu.memory_space<vmem>>, vector<1x1x128xf32>
    %18 = vector.shape_cast %17 : vector<1x1x128xf32> to vector<1x128xf32>
    %c1_16 = arith.constant 1 : index
    %c1_17 = arith.constant 1 : index
    %c0_18 = arith.constant 0 : index
    %19 = vector.load %arg4[%c1_16, %c1_17, %c0_18] : memref<3x3x128xf32, #tpu.memory_space<vmem>>, vector<1x1x128xf32>
    %20 = vector.shape_cast %19 : vector<1x1x128xf32> to vector<1x128xf32>
    %c1_19 = arith.constant 1 : index
    %c2_20 = arith.constant 2 : index
    %c0_21 = arith.constant 0 : index
    %21 = vector.load %arg4[%c1_19, %c2_20, %c0_21] : memref<3x3x128xf32, #tpu.memory_space<vmem>>, vector<1x1x128xf32>
    %22 = vector.shape_cast %21 : vector<1x1x128xf32> to vector<1x128xf32>
    %c2_22 = arith.constant 2 : index
    %c0_23 = arith.constant 0 : index
    %c0_24 = arith.constant 0 : index
    %23 = vector.load %arg4[%c2_22, %c0_23, %c0_24] : memref<3x3x128xf32, #tpu.memory_space<vmem>>, vector<1x1x128xf32>
    %24 = vector.shape_cast %23 : vector<1x1x128xf32> to vector<1x128xf32>
    %c2_25 = arith.constant 2 : index
    %c1_26 = arith.constant 1 : index
    %c0_27 = arith.constant 0 : index
    %25 = vector.load %arg4[%c2_25, %c1_26, %c0_27] : memref<3x3x128xf32, #tpu.memory_space<vmem>>, vector<1x1x128xf32>
    %26 = vector.shape_cast %25 : vector<1x1x128xf32> to vector<1x128xf32>
    %c2_28 = arith.constant 2 : index
    %c2_29 = arith.constant 2 : index
    %c0_30 = arith.constant 0 : index
    %27 = vector.load %arg4[%c2_28, %c2_29, %c0_30] : memref<3x3x128xf32, #tpu.memory_space<vmem>>, vector<1x1x128xf32>
    %28 = vector.shape_cast %27 : vector<1x1x128xf32> to vector<1x128xf32>
    %c0_31 = arith.constant 0 : index
    %c0_32 = arith.constant 0 : index
    %29 = vector.load %arg5[%c0_31, %c0_32] : memref<1x128xf32, #tpu.memory_space<vmem>>, vector<1x128xf32>
    %30 = vector.extract_strided_slice %1 {offsets = [0, 0], sizes = [7, 128], strides = [1, 1]} : vector<8x128xf32> to vector<7x128xf32>
    %31 = tpu.concatenate %7, %30 in 0 : vector<1x128xf32>, vector<7x128xf32> -> vector<8x128xf32>
    %32 = vector.extract_strided_slice %1 {offsets = [1, 0], sizes = [7, 128], strides = [1, 1]} : vector<8x128xf32> to vector<7x128xf32>
    %33 = tpu.concatenate %32, %10 in 0 : vector<7x128xf32>, vector<1x128xf32> -> vector<8x128xf32>
    %34 = vector.broadcast %12 : vector<1x128xf32> to vector<8x128xf32>
    %35 = arith.mulf %31, %34 : vector<8x128xf32>
    %36 = vector.broadcast %18 : vector<1x128xf32> to vector<8x128xf32>
    %37 = arith.mulf %1, %36 : vector<8x128xf32>
    %38 = arith.addf %35, %37 : vector<8x128xf32>
    %39 = vector.broadcast %24 : vector<1x128xf32> to vector<8x128xf32>
    %40 = arith.mulf %33, %39 : vector<8x128xf32>
    %41 = arith.addf %38, %40 : vector<8x128xf32>
    %42 = vector.broadcast %14 : vector<1x128xf32> to vector<8x128xf32>
    %43 = arith.mulf %31, %42 : vector<8x128xf32>
    %44 = vector.broadcast %20 : vector<1x128xf32> to vector<8x128xf32>
    %45 = arith.mulf %1, %44 : vector<8x128xf32>
    %46 = arith.addf %43, %45 : vector<8x128xf32>
    %47 = vector.broadcast %26 : vector<1x128xf32> to vector<8x128xf32>
    %48 = arith.mulf %33, %47 : vector<8x128xf32>
    %49 = arith.addf %46, %48 : vector<8x128xf32>
    %50 = vector.broadcast %29 : vector<1x128xf32> to vector<8x128xf32>
    %51 = arith.addf %49, %50 : vector<8x128xf32>
    %52 = vector.broadcast %16 : vector<1x128xf32> to vector<8x128xf32>
    %53 = arith.mulf %31, %52 : vector<8x128xf32>
    %54 = vector.broadcast %22 : vector<1x128xf32> to vector<8x128xf32>
    %55 = arith.mulf %1, %54 : vector<8x128xf32>
    %56 = arith.addf %53, %55 : vector<8x128xf32>
    %57 = vector.broadcast %28 : vector<1x128xf32> to vector<8x128xf32>
    %58 = arith.mulf %33, %57 : vector<8x128xf32>
    %59 = arith.addf %56, %58 : vector<8x128xf32>
    %60 = tpu.iota {dimensions = array<i32: 1>} : vector<8x128xi32>
    %cst_33 = arith.constant 0.000000e+00 : f32
    %61 = vector.broadcast %cst_33 : f32 to vector<8x128xf32>
    %c8_i32 = arith.constant 8 : i32
    %62 = tpu.dynamic_rotate %41 by %c8_i32 dim 1 : vector<8x128xf32>, i32 -> vector<8x128xf32>
    %c8_i32_34 = arith.constant 8 : i32
    %63 = vector.broadcast %c8_i32_34 : i32 to vector<8x128xi32>
    %64 = arith.cmpi sge, %60, %63 : vector<8x128xi32>
    %65 = arith.select %64, %62, %61 : vector<8x128xi1>, vector<8x128xf32>
    %66 = arith.addf %51, %65 : vector<8x128xf32>
    %c120_i32 = arith.constant 120 : i32
    %67 = tpu.dynamic_rotate %59 by %c120_i32 dim 1 : vector<8x128xf32>, i32 -> vector<8x128xf32>
    %c120_i32_35 = arith.constant 120 : i32
    %68 = vector.broadcast %c120_i32_35 : i32 to vector<8x128xi32>
    %69 = arith.cmpi slt, %60, %68 : vector<8x128xi32>
    %70 = arith.select %69, %67, %61 : vector<8x128xi1>, vector<8x128xf32>
    %71 = arith.addf %66, %70 : vector<8x128xf32>
    %72 = arith.addf %1, %71 : vector<8x128xf32>
    %c0_36 = arith.constant 0 : index
    %c0_37 = arith.constant 0 : index
    %c0_38 = arith.constant 0 : index
    %73 = vector.load %arg6[%c0_36, %c0_37, %c0_38] : memref<1x8x128xf32, #tpu.memory_space<vmem>>, vector<1x8x128xf32>
    %74 = vector.shape_cast %73 : vector<1x8x128xf32> to vector<8x128xf32>
    %75 = vector.shape_cast %72 : vector<8x128xf32> to vector<1x8x128xf32>
    tpu.vector_store %arg6[%c0_36, %c0_37, %c0_38], %75 {strides = array<i32>} : memref<1x8x128xf32, #tpu.memory_space<vmem>>, vector<1x8x128xf32>,
    return
  }
  func.func @transform_0(%arg0: i32, %arg1: i32) -> (i32, i32, i32) {
    %c0_i32 = arith.constant 0 : i32
    %c0_i32_0 = arith.constant 0 : i32
    return %arg0, %arg1, %c0_i32 : i32, i32, i32
  }
  func.func @transform_1(%arg0: i32, %arg1: i32) -> (i32, i32, i32, i32) {
    %c0_i32 = arith.constant 0 : i32
    %c0_i32_0 = arith.constant 0 : i32
    %c0_i32_1 = arith.constant 0 : i32
    return %arg0, %arg1, %c0_i32, %c0_i32_0 : i32, i32, i32, i32
  }
  func.func @transform_2(%arg0: i32, %arg1: i32) -> (i32, i32, i32) {
    %c0_i32 = arith.constant 0 : i32
    %c0_i32_0 = arith.constant 0 : i32
    %c0_i32_1 = arith.constant 0 : i32
    %c0_i32_2 = arith.constant 0 : i32
    return %c0_i32, %c0_i32_0, %c0_i32_1 : i32, i32, i32
  }
  func.func @transform_3(%arg0: i32, %arg1: i32) -> (i32, i32) {
    %c0_i32 = arith.constant 0 : i32
    %c0_i32_0 = arith.constant 0 : i32
    %c0_i32_1 = arith.constant 0 : i32
    return %c0_i32, %c0_i32_0 : i32, i32
  }
  func.func @transform_4(%arg0: i32, %arg1: i32) -> (i32, i32, i32) {
    %c0_i32 = arith.constant 0 : i32
    %c0_i32_0 = arith.constant 0 : i32
    return %arg0, %arg1, %c0_i32 : i32, i32, i32
  }
}

</mosaic_0001>

<llo_original>
// kernel: tpu_custom_call.1
$region0: #{tpu_custom_call.1}
  #allocation0 [shape = 'u32[]', space=smem, size = 0x4, offset = 0x4, fixed_abs, tag = 'smem constant byte address 0x4 - core index']
  #allocation1 [shape = 'u32[144,128]{1,0:T(1,128)}', space=vmem, size = 0x12000, scoped, tag = 'internal scratch']
  %s0 = inlined_call_operand.hbm [shape: f32[2,16,128], index: 0, kind: input, shape index: {}]
  %s1 = inlined_call_operand.hbm [shape: f32[2,2,2,128], index: 1, kind: input, shape index: {}]
  %s2 = inlined_call_operand.hbm [shape: f32[3,3,128], index: 2, kind: input, shape index: {}]
  %s3 = inlined_call_operand.vmem [shape: f32[1,128], index: 3, kind: input, shape index: {}]
  %s4 = inlined_call_operand.hbm [shape: f32[2,16,128], index: 4, kind: output, shape index: {}]
  %s5 = sld [smem:[#allocation0]]
  $region61: #{tpu_custom_call.1} parent=0
    _
  %s7 = ssub.s32 1, %s5
  %s8 = scalar_select 0, %s7, %s5
  $region1: #{tpu_custom_call.1} parent=0
    #allocation2 [shape = 'u8[8192]{0}', space=vmem, size = 0x2000, scoped, tag = 'input window, operand 0']
    #allocation3 [shape = 's32[2]{0}', space=sflag, size = 0x8, scoped, tag = 'scoped memory for tpu_custom_call.1']
    #allocation4 [shape = 's32[2]{0}', space=sflag, size = 0x8, scoped, tag = 'scoped memory for tpu_custom_call.1']
    #allocation5 [shape = 'u8[2048]{0}', space=vmem, size = 0x800, scoped, tag = 'input window, operand 1']
    #allocation6 [shape = 's32[2]{0}', space=sflag, size = 0x8, scoped, tag = 'scoped memory for tpu_custom_call.1']
    #allocation7 [shape = 'u8[6144]{0}', space=vmem, size = 0x1800, scoped, tag = 'input window, operand 2, single buffered']
    #allocation8 [shape = 'u8[8192]{0}', space=vmem, size = 0x2000, scoped, tag = 'output window, operand 0']
    %9 = vsyncpa [#allocation3], 0
    %s10 = scalar_lea.sflag [#allocation3], 1
    %11 = vsyncpa %s10, 0
    %12 = vsyncpa [#allocation6], 0
    %s13 = scalar_lea.sflag [#allocation6], 1
    %14 = vsyncpa %s13, 0
    %15 = vsyncpa [#allocation4], 0
    %s16 = scalar_lea.sflag [#allocation4], 1
    %17 = vsyncpa %s16, 0
    loop: start=0, step=1, limit=6
    $region2: #{tpu_custom_call.1} parent=1 // loop_pre_header
      _
    $region3: #{tpu_custom_call.1} parent=1 // loop_header
      %s19 = sphi 0, %s23
      %p20 = scmp.ge.s32.totalorder %s19, 6
      %s26 = sphi 0, %s38
      %s27 = sphi 0, %s34
      %s28 = sphi 0, %s26
      %s29 = sphi 0, %s27
      %s30 = sphi 0, %s28
      %s31 = sphi 0, %s29
      %s43 = sphi 0, %s45
      %s46 = sphi 0, %s43
      %s47 = sphi 0, %s46
      %s63 = sphi 0, %s47
      %s71 = sphi 0, %s73
      %s74 = sphi 0, %s71
      %s75 = sphi 0, %s74
      %s91 = sphi 0, %s75
      %s95 = sphi 0, %s95
      %s97 = sphi 0, %s95
      %s98 = sphi 0, %s97
      %s112 = sphi 0, %s98
      %s116 = sphi 0, %s116
      %s118 = sphi 0, %s116
      %s119 = sphi 0, %s118
      %s133 = sphi 0, %s119
      %s141 = sphi 0, %s143
      %s144 = sphi 0, %s141
      %s145 = sphi 0, %s144
      %s161 = sphi 0, %s145
    $region4: #{tpu_custom_call.1} parent=1 // loop_header_branch
      %22 = sbr.rel (%p20) target = $region8
    $region5: #{tpu_custom_call.1} parent=1 // loop_body
      %s24 = ssub.s32 %s19, 1
      %s25 = ssub.s32 %s19, 2
      %s32 = sadd.s32 1, %s27
      %p33 = scmp.ge.s32.totalorder %s32, 2
      %s34 = scalar_select %p33, 0, %s32
      %s35 = sadd.s32 1, %s26
      %s36 = scalar_select %p33, %s35, %s26
      %p37 = scmp.ge.s32.totalorder %s36, 2
      %s38 = scalar_select %p37, 0, %s36
      %s39 = ssub.s32 %s26, %s38
      %s40 = ssub.s32 %s27, %s34
      %s41 = sor.u32 %s39, %s40
      %p42 = scmp.eq.s32.totalorder %s41, 0
      %s44 = sadd.s32 %s43, 1
      %s45 = scalar_select %p42, %s43, %s44
      %p48 = pneg %p42
      %p49 = scmp.eq.s32.totalorder %s19, 3
      %p50 = por %p48, %p49
      %p51 = scmp.ne.s32.totalorder %s43, %s46
      %p52 = scmp.eq.s32.totalorder %s19, 0
      %p53 = por %p51, %p52
      %p54 = scmp.ne.s32.totalorder %s43, %s46
      %p55 = scmp.eq.s32.totalorder %s24, 3
      %p56 = por %p54, %p55
      %p57 = scmp.ne.s32.totalorder %s46, %s47
      %p58 = scmp.eq.s32.totalorder %s24, 0
      %p59 = por %p57, %p58
      %p60 = scmp.ne.s32.totalorder %s46, %s47
      %p61 = scmp.eq.s32.totalorder %s25, 3
      %p62 = por %p60, %p61
      %p64 = scmp.ne.s32.totalorder %s47, %s63
      %p65 = scmp.eq.s32.totalorder %s25, 0
      %p66 = por %p64, %p65
      %s67 = ssub.s32 %s26, %s38
      %s68 = ssub.s32 %s27, %s34
      %s69 = sor.u32 %s67, %s68
      %p70 = scmp.eq.s32.totalorder %s69, 0
      %s72 = sadd.s32 %s71, 1
      %s73 = scalar_select %p70, %s71, %s72
      %p76 = pneg %p70
      %p77 = scmp.eq.s32.totalorder %s19, 3
      %p78 = por %p76, %p77
      %p79 = scmp.ne.s32.totalorder %s71, %s74
      %p80 = scmp.eq.s32.totalorder %s19, 0
      %p81 = por %p79, %p80
      %p82 = scmp.ne.s32.totalorder %s71, %s74
      %p83 = scmp.eq.s32.totalorder %s24, 3
      %p84 = por %p82, %p83
      %p85 = scmp.ne.s32.totalorder %s74, %s75
      %p86 = scmp.eq.s32.totalorder %s24, 0
      %p87 = por %p85, %p86
      %p88 = scmp.ne.s32.totalorder %s74, %s75
      %p89 = scmp.eq.s32.totalorder %s25, 3
      %p90 = por %p88, %p89
      %p92 = scmp.ne.s32.totalorder %s75, %s91
      %p93 = scmp.eq.s32.totalorder %s25, 0
      %p94 = por %p92, %p93
      %s96 = sadd.s32 %s95, 1
      %p99 = scmp.eq.s32.totalorder %s19, 3
      %p100 = scmp.ne.s32.totalorder %s95, %s97
      %p101 = scmp.eq.s32.totalorder %s19, 0
      %p102 = por %p100, %p101
      %p103 = scmp.ne.s32.totalorder %s95, %s97
      %p104 = scmp.eq.s32.totalorder %s24, 3
      %p105 = por %p103, %p104
      %p106 = scmp.ne.s32.totalorder %s97, %s98
      %p107 = scmp.eq.s32.totalorder %s24, 0
      %p108 = por %p106, %p107
      %p109 = scmp.ne.s32.totalorder %s97, %s98
      %p110 = scmp.eq.s32.totalorder %s25, 3
      %p111 = por %p109, %p110
      %p113 = scmp.ne.s32.totalorder %s98, %s112
      %p114 = scmp.eq.s32.totalorder %s25, 0
      %p115 = por %p113, %p114
      %s117 = sadd.s32 %s116, 1
      %p120 = scmp.eq.s32.totalorder %s19, 3
      %p121 = scmp.ne.s32.totalorder %s116, %s118
      %p122 = scmp.eq.s32.totalorder %s19, 0
      %p123 = por %p121, %p122
      %p124 = scmp.ne.s32.totalorder %s116, %s118
      %p125 = scmp.eq.s32.totalorder %s24, 3
      %p126 = por %p124, %p125
      %p127 = scmp.ne.s32.totalorder %s118, %s119
      %p128 = scmp.eq.s32.totalorder %s24, 0
      %p129 = por %p127, %p128
      %p130 = scmp.ne.s32.totalorder %s118, %s119
      %p131 = scmp.eq.s32.totalorder %s25, 3
      %p132 = por %p130, %p131
      %p134 = scmp.ne.s32.totalorder %s119, %s133
      %p135 = scmp.eq.s32.totalorder %s25, 0
      %p136 = por %p134, %p135
      %s137 = ssub.s32 %s26, %s38
      %s138 = ssub.s32 %s27, %s34
      %s139 = sor.u32 %s137, %s138
      %p140 = scmp.eq.s32.totalorder %s139, 0
      %s142 = sadd.s32 %s141, 1
      %s143 = scalar_select %p140, %s141, %s142
      %p146 = pneg %p140
      %p147 = scmp.eq.s32.totalorder %s19, 3
      %p148 = por %p146, %p147
      %p149 = scmp.ne.s32.totalorder %s141, %s144
      %p150 = scmp.eq.s32.totalorder %s19, 0
      %p151 = por %p149, %p150
      %p152 = scmp.ne.s32.totalorder %s141, %s144
      %p153 = scmp.eq.s32.totalorder %s24, 3
      %p154 = por %p152, %p153
      %p155 = scmp.ne.s32.totalorder %s144, %s145
      %p156 = scmp.eq.s32.totalorder %s24, 0
      %p157 = por %p155, %p156
      %p158 = scmp.ne.s32.totalorder %s144, %s145
      %p159 = scmp.eq.s32.totalorder %s25, 3
      %p160 = por %p158, %p159
      %p162 = scmp.ne.s32.totalorder %s145, %s161
      %p163 = scmp.eq.s32.totalorder %s25, 0
      %p164 = por %p162, %p163
      %p165 = scmp.le.s32.totalorder 1, %s19
      %p166 = scmp.lt.s32.totalorder %s19, 5
      %p167 = pnand %p165, %p166
      %p168 = pneg %p167
      // Predicated region
      $region9: #{tpu_custom_call.1} parent=5 // pred_check
        _
      $region10: #{tpu_custom_call.1} parent=5 // pred_check_branch
        %170 = sbr.rel (%p167) target = $region12
      $region11: #{tpu_custom_call.1} parent=5 // pred_region
        %s171 = ssub.s32 %s19, 1
        // Predicated region
        $region13: #{tpu_custom_call.1} parent=11 // pred_check
          %p172 = pneg %p108
        $region14: #{tpu_custom_call.1} parent=11 // pred_check_branch
          %174 = sbr.rel (%p172) target = $region16
        $region15: #{tpu_custom_call.1} parent=11 // pred_region
          %s176 = ssub.s32 192, 192
          %177 = vsyncadd [#allocation6], %s176
          %s178 = sshll.u32 [#allocation7], 4
          %s179 = int_to_ptr.vmem [resolvable:$true] %s178
          %184 = dma.hbm_to_vmem [thread:$0]  %s2, 192, %s179, [#allocation6], 64, 64, 4
        $region16: #{tpu_custom_call.1} parent=11 // pred_fallthru
          _
        // Predicated region
        $region17: #{tpu_custom_call.1} parent=11 // pred_check
          %p185 = pneg %p129
        $region18: #{tpu_custom_call.1} parent=11 // pred_check_branch
          %187 = sbr.rel (%p185) target = $region20
        $region19: #{tpu_custom_call.1} parent=11 // pred_region
          _
        $region20: #{tpu_custom_call.1} parent=11 // pred_fallthru
          _
      $region12: #{tpu_custom_call.1} parent=5 // pred_fallthru
        _
      %p188 = scmp.lt.s32.totalorder %s19, 4
      // Predicated region
      $region21: #{tpu_custom_call.1} parent=5 // pred_check
        %p189 = pneg %p188
      $region22: #{tpu_custom_call.1} parent=5 // pred_check_branch
        %191 = sbr.rel (%p189) target = $region24
      $region23: #{tpu_custom_call.1} parent=5 // pred_region
        // Predicated region
        $region25: #{tpu_custom_call.1} parent=23 // pred_check
          %p192 = pneg %p53
        $region26: #{tpu_custom_call.1} parent=23 // pred_check_branch
          %194 = sbr.rel (%p192) target = $region28
        $region27: #{tpu_custom_call.1} parent=23 // pred_region
          %s195 = sand.u32 %s43, 1
          %s196 = scalar_lea.sflag [#allocation3], %s195
          %s197 = sand.u32 %s43, 1
          %s198 = smul.addr %s197, 8
          %s199 = scalar_lea.vmem [#allocation2], %s198
          %s201 = ssub.s32 128, 128
          %202 = vsyncadd %s196, %s201
          %s203 = smul.addr %s26, 2
          %s204 = sadd.s32 %s27, %s203
          %s205 = smul.addr %s204, 128
          %s206 = scalar_lea.hbm %s0, %s205
          %s208 = sshll.u32 %s199, 4
          %s209 = int_to_ptr.vmem [resolvable:$true] %s208
          %211 = dma.hbm_to_vmem [thread:$0]  %s206, 128, %s209, %s196
        $region28: #{tpu_custom_call.1} parent=23 // pred_fallthru
          _
        // Predicated region
        $region29: #{tpu_custom_call.1} parent=23 // pred_check
          %p212 = pneg %p81
        $region30: #{tpu_custom_call.1} parent=23 // pred_check_branch
          %214 = sbr.rel (%p212) target = $region32
        $region31: #{tpu_custom_call.1} parent=23 // pred_region
          %s215 = sand.u32 %s19, 1
          %s216 = scalar_lea.sflag [#allocation6], %s215
          %s217 = sand.u32 %s71, 1
          %s218 = smul.addr %s217, 2
          %s219 = scalar_lea.vmem [#allocation5], %s218
          %s221 = ssub.s32 32, 32
          %222 = vsyncadd %s216, %s221
          %s223 = smul.addr %s26, 2
          %s224 = sadd.s32 %s27, %s223
          %s225 = smul.addr %s224, 32
          %s226 = scalar_lea.hbm %s1, %s225
          %s228 = sshll.u32 %s219, 4
          %s229 = int_to_ptr.vmem [resolvable:$true] %s228
          %231 = dma.hbm_to_vmem [thread:$0]  %s226, 32, %s229, %s216
        $region32: #{tpu_custom_call.1} parent=23 // pred_fallthru
          _
      $region24: #{tpu_custom_call.1} parent=5 // pred_fallthru
        _
      %p232 = scmp.le.s32.totalorder 1, %s19
      %p233 = scmp.lt.s32.totalorder %s19, 5
      %p234 = pnand %p232, %p233
      %p235 = pneg %p234
      // Predicated region
      $region33: #{tpu_custom_call.1} parent=5 // pred_check
        _
      $region34: #{tpu_custom_call.1} parent=5 // pred_check_branch
        %237 = sbr.rel (%p234) target = $region36
      $region35: #{tpu_custom_call.1} parent=5 // pred_region
        %s238 = ssub.s32 %s19, 1
        %s239 = sand.u32 %s46, 1
        %s240 = scalar_lea.sflag [#allocation3], %s239
        %s241 = sand.u32 %s46, 1
        %s242 = smul.addr %s241, 8
        %s243 = scalar_lea.vmem [#allocation2], %s242
        // Predicated region
        $region37: #{tpu_custom_call.1} parent=35 // pred_check
          %p244 = pneg %p59
        $region38: #{tpu_custom_call.1} parent=35 // pred_check_branch
          %246 = sbr.rel (%p244) target = $region40
        $region39: #{tpu_custom_call.1} parent=35 // pred_region
          %247 = dma.done %s240, 128
        $region40: #{tpu_custom_call.1} parent=35 // pred_fallthru
          _
        %s248 = sand.u32 %s24, 1
        %s249 = scalar_lea.sflag [#allocation6], %s248
        %s250 = sand.u32 %s74, 1
        %s251 = smul.addr %s250, 2
        %s252 = scalar_lea.vmem [#allocation5], %s251
        // Predicated region
        $region41: #{tpu_custom_call.1} parent=35 // pred_check
          %p253 = pneg %p87
        $region42: #{tpu_custom_call.1} parent=35 // pred_check_branch
          %255 = sbr.rel (%p253) target = $region44
        $region43: #{tpu_custom_call.1} parent=35 // pred_region
          %256 = dma.done %s249, 32
        $region44: #{tpu_custom_call.1} parent=35 // pred_fallthru
          _
        // Predicated region
        $region45: #{tpu_custom_call.1} parent=35 // pred_check
          %p257 = pneg %p108
        $region46: #{tpu_custom_call.1} parent=35 // pred_check_branch
          %259 = sbr.rel (%p257) target = $region48
        $region47: #{tpu_custom_call.1} parent=35 // pred_region
          %260 = dma.done [#allocation6], 192
        $region48: #{tpu_custom_call.1} parent=35 // pred_fallthru
          _
        %s261 = sand.u32 %s46, 1
        %s262 = scalar_lea.sflag [#allocation3], %s261
        %s263 = sand.u32 %s46, 1
        %s264 = smul.addr %s263, 8
        %s265 = scalar_lea.vmem [#allocation2], %s264
        %p266 = pneg %p59
        %p267 = pneg %p56
        %s268 = sand.u32 %s24, 1
        %s269 = scalar_lea.sflag [#allocation6], %s268
        %s270 = sand.u32 %s74, 1
        %s271 = smul.addr %s270, 2
        %s272 = scalar_lea.vmem [#allocation5], %s271
        %p273 = pneg %p87
        %p274 = pneg %p84
        %p275 = pneg %p108
        %p276 = pneg %p105
        %p277 = pneg %p129
        %p278 = pneg %p126
        %p279 = pneg %p157
        %p280 = pneg %p154
        %s281 = sand.u32 %s144, 1
        %s282 = scalar_lea.sflag [#allocation4], %s281
        %s283 = sand.u32 %s144, 1
        %s284 = smul.addr %s283, 8
        %s285 = scalar_lea.vmem [#allocation8], %s284
        %v286 = vld [vmem:[%s243] sm:$0xff]
        %v287 = vld [vmem:[%s252] sm:$0x3]
        %p288 = scmp.gt.s32.totalorder %s29, 0
        %s289 = scalar_select %p288, 1, 0
        %v290 = vstv %s289
        %vm291 = vcmp.eq.s32.totalorder %v290, 1
        %v292 = vsel %vm291, %v287, 0.0
        %p293 = scmp.lt.s32.totalorder %s29, 1
        %s294 = scalar_select %p293, 1, 0
        %v295 = vstv %s294
        %vm296 = vcmp.eq.s32.totalorder %v295, 1
        %v297 = vsel %vm296, %v287, 0.0
        %v298 = vld [vmem:[#allocation7] sm:$0x1]
        %v299 = vld [vmem:[#allocation7 + $0x1] sm:$0x1]
        %v300 = vld [vmem:[#allocation7 + $0x2] sm:$0x1]
        %s301 = scalar_lea.vmem [#allocation7], 4
        %v302 = vld [vmem:[%s301] sm:$0x1]
        %v303 = vld [vmem:[%s301 + $0x1] sm:$0x1]
        %v304 = vld [vmem:[%s301 + $0x2] sm:$0x1]
        %s305 = scalar_lea.vmem [#allocation7], 8
        %v306 = vld [vmem:[%s305] sm:$0x1]
        %v307 = vld [vmem:[%s305 + $0x1] sm:$0x1]
        %v308 = vld [vmem:[%s305 + $0x2] sm:$0x1]
        %v309 = vld [vmem:[%s3] sm:$0x1]
        %v311 = vrot.slane %v286, 7
        %vm313 = vcmask 1040384
        %v314 = vsel %vm313, %v292, %v311
        %v315 = vrot.slane %v286, 1
        %v318 = vrot.slane %v297, 2
        %vm320 = vcmask 1046528
        %v321 = vsel %vm320, %v315, %v318
        %v322 = vlaneseq
        %v323 = vshrl.u32 %v322, 7
        %v324 = vsub.s32 0, %v323
        %v325 = vrot.slane %v298, %v324
        %v326 = vmul.f32 %v314, %v325
        %v327 = vlaneseq
        %v328 = vshrl.u32 %v327, 7
        %v329 = vsub.s32 0, %v328
        %v330 = vrot.slane %v302, %v329
        %v331 = vmul.f32 %v286, %v330
        %v332 = vadd.f32 %v326, %v331
        %v333 = vlaneseq
        %v334 = vshrl.u32 %v333, 7
        %v335 = vsub.s32 0, %v334
        %v336 = vrot.slane %v306, %v335
        %v337 = vmul.f32 %v321, %v336
        %v338 = vadd.f32 %v332, %v337
        %v339 = vlaneseq
        %v340 = vshrl.u32 %v339, 7
        %v341 = vsub.s32 0, %v340
        %v342 = vrot.slane %v299, %v341
        %v343 = vmul.f32 %v314, %v342
        %v344 = vlaneseq
        %v345 = vshrl.u32 %v344, 7
        %v346 = vsub.s32 0, %v345
        %v347 = vrot.slane %v303, %v346
        %v348 = vmul.f32 %v286, %v347
        %v349 = vadd.f32 %v343, %v348
        %v350 = vlaneseq
        %v351 = vshrl.u32 %v350, 7
        %v352 = vsub.s32 0, %v351
        %v353 = vrot.slane %v307, %v352
        %v354 = vmul.f32 %v321, %v353
        %v355 = vadd.f32 %v349, %v354
        %v357 = vlaneseq
        %v358 = vshrl.u32 %v357, 7
        %v359 = vsub.s32 0, %v358
        %v360 = vrot.slane %v309, %v359
        %v362 = vadd.f32 %v355, %v360
        %v363 = vlaneseq
        %v364 = vshrl.u32 %v363, 7
        %v365 = vsub.s32 0, %v364
        %v366 = vrot.slane %v300, %v365
        %v367 = vmul.f32 %v314, %v366
        %v368 = vlaneseq
        %v369 = vshrl.u32 %v368, 7
        %v370 = vsub.s32 0, %v369
        %v371 = vrot.slane %v304, %v370
        %v372 = vmul.f32 %v286, %v371
        %v373 = vadd.f32 %v367, %v372
        %v374 = vlaneseq
        %v375 = vshrl.u32 %v374, 7
        %v376 = vsub.s32 0, %v375
        %v377 = vrot.slane %v308, %v376
        %v378 = vmul.f32 %v321, %v377
        %v379 = vadd.f32 %v373, %v378
        %v380 = vlaneseq
        %v381 = vand.u32 %v380, 127
        %382 = vrot.lane.b32.xlu0 %v338, 8
        %v383 = vpop.permute.xlu0 %382
        %vm384 = vcmp.ge.s32.totalorder %v381, 8
        %v385 = vsel %vm384, %v383, 0.0
        %v386 = vadd.f32 %v362, %v385
        %387 = vrot.lane.b32.xlu0 %v379, 120
        %v388 = vpop.permute.xlu0 %387
        %vm389 = vcmp.lt.s32.totalorder %v381, 120
        %v390 = vsel %vm389, %v388, 0.0
        %v391 = vadd.f32 %v386, %v390
        %v392 = vadd.f32 %v286, %v391
        %393 = vst [vmem:[%s285] sm:$0xff] %v392
        %s394 = sand.u32 %s144, 1
        %s395 = scalar_lea.sflag [#allocation4], %s394
        %s396 = sand.u32 %s144, 1
        %s397 = smul.addr %s396, 8
        %s398 = scalar_lea.vmem [#allocation8], %s397
        // Predicated region
        $region49: #{tpu_custom_call.1} parent=35 // pred_check
          %p399 = pneg %p154
        $region50: #{tpu_custom_call.1} parent=35 // pred_check_branch
          %401 = sbr.rel (%p399) target = $region52
        $region51: #{tpu_custom_call.1} parent=35 // pred_region
          %s403 = ssub.s32 128, 128
          %404 = vsyncadd %s395, %s403
          %s405 = smul.addr %s28, 2
          %s406 = sadd.s32 %s29, %s405
          %s407 = smul.addr %s406, 128
          %s408 = scalar_lea.hbm %s4, %s407
          %s410 = sshll.u32 %s398, 4
          %s411 = int_to_ptr.vmem [resolvable:$true] %s410
          %413 = dma.vmem_to_hbm [thread:$0]  %s411, 128, %s408, %s395
        $region52: #{tpu_custom_call.1} parent=35 // pred_fallthru
          _
      $region36: #{tpu_custom_call.1} parent=5 // pred_fallthru
        _
      %p414 = scmp.le.s32.totalorder 2, %s19
      // Predicated region
      $region53: #{tpu_custom_call.1} parent=5 // pred_check
        %p415 = pneg %p414
      $region54: #{tpu_custom_call.1} parent=5 // pred_check_branch
        %417 = sbr.rel (%p415) target = $region56
      $region55: #{tpu_custom_call.1} parent=5 // pred_region
        %s418 = ssub.s32 %s19, 2
        // Predicated region
        $region57: #{tpu_custom_call.1} parent=55 // pred_check
          %p419 = pneg %p160
        $region58: #{tpu_custom_call.1} parent=55 // pred_check_branch
          %421 = sbr.rel (%p419) target = $region60
        $region59: #{tpu_custom_call.1} parent=55 // pred_region
          %s422 = sand.u32 %s145, 1
          %s423 = scalar_lea.sflag [#allocation4], %s422
          %s424 = sand.u32 %s145, 1
          %s425 = smul.addr %s424, 8
          %s426 = scalar_lea.vmem [#allocation8], %s425
          %427 = dma.done %s423, 128
        $region60: #{tpu_custom_call.1} parent=55 // pred_fallthru
          _
      $region56: #{tpu_custom_call.1} parent=5 // pred_fallthru
        _
    $region6: #{tpu_custom_call.1} parent=1 // loop_footer
      %s23 = sadd.s32 1, %s19
    $region7: #{tpu_custom_call.1} parent=1 // loop_footer_branch
      %18 = sbr.rel target = $region3
    $region8: #{tpu_custom_call.1} parent=1 // loop_exit
      _
    %428 = vsyncpa [#allocation3], 1
    %s429 = scalar_lea.sflag [#allocation3], 1
    %430 = vsyncpa %s429, 1
    %431 = vsyncpa [#allocation6], 1
    %s432 = scalar_lea.sflag [#allocation6], 1
    %433 = vsyncpa %s432, 1
    %434 = vsyncpa [#allocation4], 1
    %s435 = scalar_lea.sflag [#allocation4], 1
    %436 = vsyncpa %s435, 1

</llo_original>
